<compile_context>
chip_gen: v6e
topology: v6e:2x2x1
jax: 0.10.0
libtpu: 0.0.40
codegen_flags: <defaults>
</compile_context>

<pallas_src>
import functools

import numpy as np

import jax
import jax.numpy as jnp
from jax.experimental import pallas as pl
from jax.experimental.pallas import tpu as pltpu


def _conv_bn_silu_kernel(x_ref, w_ref, b_ref, m_ref, o_ref, patches_ref,
                         *, H, W, Cin, Cout, K):
    """One batch element per grid step.

    x_ref:       (Cin, H*W)        flat CHW input (no spatial padding)
    w_ref:       (Cout, K*K*Cin)   conv weights with BN scale folded in
    b_ref:       (Cout, 1)         folded BN bias (beta - mean*scale)
    m_ref:       (K*K, H*W)        0/1 validity mask per conv tap (halo)
    o_ref:       (Cout, H*W)       flat CHW output
    patches_ref: (K*K*Cin, H*W)    VMEM scratch for the im2col patch matrix
    """
    HW = H * W
    pad = K // 2
    x = x_ref[...]                                           # (Cin, HW) f32

    # Build patches[(kh*K + kw)*Cin + c, h*W + w] = x[c, h+kh-pad, w+kw-pad]
    # (zero outside the image) via lane rotations + masked edge taps.
    for kh in range(K):
        for kw in range(K):
            t = kh * K + kw
            delta = (kh - pad) * W + (kw - pad)
            tap = x if delta == 0 else pltpu.roll(x, (-delta) % HW, 1)
            tap = tap * m_ref[t:t + 1, :]                    # zero halo taps
            patches_ref[t * Cin:(t + 1) * Cin, :] = tap

    # One lane-dense MXU contraction: (Cout, K*K*Cin) @ (K*K*Cin, H*W).
    acc = jnp.dot(w_ref[...], patches_ref[...],
                  preferred_element_type=jnp.float32)        # (Cout, HW) f32
    y = acc + b_ref[...]                                     # folded BN bias
    y = y * jax.nn.sigmoid(y)                                # SiLU
    o_ref[...] = y.astype(o_ref.dtype)


def conv_bn_silu(x_nchw, weight, bn_gamma, bn_beta, bn_mean, bn_var,
                 *, eps=1e-5):
    """SiLU(BN(Conv2d(x, W, stride=1, pad=k//2, groups=1, dilation=1, bias=False))).

    x_nchw: (N, Cin, H, W) float32 ; weight: (Cout, Cin, K, K) float32.
    Returns (N, Cout, H, W).
    """
    N, Cin, H, W = x_nchw.shape
    Cout, Cin_w, K, Kw = weight.shape
    assert Cin_w == Cin and K == Kw and K % 2 == 1
    HW = H * W
    pad = K // 2  # autopad(k) for dilation=1

    # ---- wrapper glue: free reshapes only (no pad / transpose round-trips) ----
    x_flat = x_nchw.reshape(N, Cin, HW)

    # Fold eval-mode BatchNorm into the conv weights + a per-channel bias.
    scale = (bn_gamma / jnp.sqrt(bn_var + eps)).astype(jnp.float32)       # (Cout,)
    bias = (bn_beta - bn_mean * scale).reshape(Cout, 1).astype(jnp.float32)
    # (Cout,Cin,K,K) -> (Cout,K,K,Cin) -> (Cout, K*K*Cin); column order matches
    # the in-kernel patch rows ((kh,kw) major, Cin minor).
    w_flat = (weight * scale[:, None, None, None]).astype(jnp.float32)
    w_flat = jnp.transpose(w_flat, (0, 2, 3, 1)).reshape(Cout, K * K * Cin)

    # Precomputed 0/1 validity mask per conv tap (handles the 'same' halo
    # inside the kernel instead of jnp.pad in the wrapper).
    hh, ww = np.meshgrid(np.arange(H), np.arange(W), indexing="ij")
    mask_list = []
    for kh in range(K):
        for kw in range(K):
            dh, dw = kh - pad, kw - pad
            valid = ((hh + dh >= 0) & (hh + dh < H) &
                     (ww + dw >= 0) & (ww + dw < W))
            mask_list.append(valid.reshape(-1))
    masks = jnp.asarray(np.stack(mask_list).astype(np.float32))           # (K*K, HW)

    kernel = functools.partial(_conv_bn_silu_kernel,
                               H=H, W=W, Cin=Cin, Cout=Cout, K=K)

    out_flat = pl.pallas_call(
        kernel,
        out_shape=jax.ShapeDtypeStruct((N, Cout, HW), x_nchw.dtype),
        grid=(N,),
        in_specs=[
            pl.BlockSpec((None, Cin, HW), lambda n: (n, 0, 0)),
            pl.BlockSpec((Cout, K * K * Cin), lambda n: (0, 0)),
            pl.BlockSpec((Cout, 1), lambda n: (0, 0)),
            pl.BlockSpec((K * K, HW), lambda n: (0, 0)),
        ],
        out_specs=pl.BlockSpec((None, Cout, HW), lambda n: (n, 0, 0)),
        scratch_shapes=[pltpu.VMEM((K * K * Cin, HW), jnp.float32)],
        compiler_params=pltpu.CompilerParams(
            dimension_semantics=("parallel",)),
    )(x_flat, w_flat, bias, masks)

    return out_flat.reshape(N, Cout, H, W)


def _reference(x_nchw, weight, bn_gamma, bn_beta, bn_mean, bn_var, eps=1e-5):
    """Pure-JAX reference (lax conv) for correctness check."""
    K = weight.shape[-1]
    y = jax.lax.conv_general_dilated(
        x_nchw, weight, window_strides=(1, 1),
        padding=[(K // 2, K // 2)] * 2,
        dimension_numbers=("NCHW", "OIHW", "NCHW"))
    scale = (bn_gamma / jnp.sqrt(bn_var + eps)).reshape(1, -1, 1, 1)
    bias = (bn_beta - bn_mean * bn_gamma / jnp.sqrt(bn_var + eps)).reshape(1, -1, 1, 1)
    y = y * scale + bias
    return y * jax.nn.sigmoid(y)


if __name__ == "__main__":
    # Module config: Conv(c1=4, c2=8, k=3, s=1) -> pad=1, groups=1, dilation=1.
    c1, c2, k = 4, 8, 3
    N, H, W = 2, 16, 16

    key = jax.random.PRNGKey(0)
    kx, kw_, kg, kb, km, kv = jax.random.split(key, 6)
    x = jax.random.normal(kx, (N, c1, H, W), dtype=jnp.float32)
    fan_in = c1 * k * k
    weight = jax.random.normal(kw_, (c2, c1, k, k), dtype=jnp.float32) * (fan_in ** -0.5)
    # BatchNorm2d parameters / running stats (eval mode).
    gamma = 1.0 + 0.1 * jax.random.normal(kg, (c2,), dtype=jnp.float32)
    beta = 0.1 * jax.random.normal(kb, (c2,), dtype=jnp.float32)
    running_mean = 0.1 * jax.random.normal(km, (c2,), dtype=jnp.float32)
    running_var = jax.random.uniform(kv, (c2,), dtype=jnp.float32,
                                     minval=0.5, maxval=1.5)

    out = conv_bn_silu(x, weight, gamma, beta, running_mean, running_var)
    out = jax.block_until_ready(out)

    ref = _reference(x, weight, gamma, beta, running_mean, running_var)
    assert out.shape == (N, c2, H, W)
    assert jnp.allclose(out, ref, atol=2e-4, rtol=1e-3), "mismatch vs reference"

    print("KERNEL_OK")
</pallas_src>

<mosaic_0001>
module attributes {stable_mosaic.version = 11 : i64} {
  func.func @_conv_bn_silu_kernel(%arg0: i32, %arg1: memref<1x4x256xf32, #tpu.memory_space<vmem>>, %arg2: memref<8x36xf32, #tpu.memory_space<vmem>>, %arg3: memref<8x1xf32, #tpu.memory_space<vmem>>, %arg4: memref<9x256xf32, #tpu.memory_space<vmem>>, %arg5: memref<1x8x256xf32, #tpu.memory_space<vmem>>, %arg6: memref<36x256xf32, #tpu.memory_space<vmem>>) attributes {dimension_semantics = [#tpu.dimension_semantics<parallel>], iteration_bounds = array<i64: 2>, scalar_prefetch = 0 : i64, scratch_operands = 1 : i64, tpu.core_type = #tpu.core_type<tc>, window_params = [{transform_indices = @transform_0, window_bounds = array<i64: 1, 4, 256>}, {pipeline_mode = #tpu.pipeline_mode<synchronous>, transform_indices = @transform_1, window_bounds = array<i64: 8, 36>}, {pipeline_mode = #tpu.pipeline_mode<synchronous>, transform_indices = @transform_2, window_bounds = array<i64: 8, 1>}, {pipeline_mode = #tpu.pipeline_mode<synchronous>, transform_indices = @transform_3, window_bounds = array<i64: 9, 256>}, {transform_indices = @transform_4, window_bounds = array<i64: 1, 8, 256>}]} {
    %c0 = arith.constant 0 : index
    %c0_0 = arith.constant 0 : index
    %c0_1 = arith.constant 0 : index
    %0 = vector.load %arg1[%c0, %c0_0, %c0_1] : memref<1x4x256xf32, #tpu.memory_space<vmem>>, vector<1x4x256xf32>
    %1 = vector.shape_cast %0 : vector<1x4x256xf32> to vector<4x256xf32>
    %c17_i32 = arith.constant 17 : i32
    %2 = tpu.dynamic_rotate %1 by %c17_i32 dim 1 : vector<4x256xf32>, i32 -> vector<4x256xf32>
    %c0_2 = arith.constant 0 : index
    %c0_3 = arith.constant 0 : index
    %3 = vector.load %arg4[%c0_2, %c0_3] : memref<9x256xf32, #tpu.memory_space<vmem>>, vector<1x256xf32>
    %4 = vector.broadcast %3 : vector<1x256xf32> to vector<4x256xf32>
    %5 = arith.mulf %2, %4 : vector<4x256xf32>
    %c0_4 = arith.constant 0 : index
    %c0_5 = arith.constant 0 : index
    %6 = vector.load %arg6[%c0_4, %c0_5] : memref<36x256xf32, #tpu.memory_space<vmem>>, vector<4x256xf32>
    tpu.vector_store %arg6[%c0_4, %c0_5], %5 {strides = array<i32>} : memref<36x256xf32, #tpu.memory_space<vmem>>, vector<4x256xf32>,
    %c16_i32 = arith.constant 16 : i32
    %7 = tpu.dynamic_rotate %1 by %c16_i32 dim 1 : vector<4x256xf32>, i32 -> vector<4x256xf32>
    %c1 = arith.constant 1 : index
    %c0_6 = arith.constant 0 : index
    %8 = vector.load %arg4[%c1, %c0_6] : memref<9x256xf32, #tpu.memory_space<vmem>>, vector<1x256xf32>
    %9 = vector.broadcast %8 : vector<1x256xf32> to vector<4x256xf32>
    %10 = arith.mulf %7, %9 : vector<4x256xf32>
    %c4 = arith.constant 4 : index
    %c0_7 = arith.constant 0 : index
    %11 = vector.load %arg6[%c4, %c0_7] : memref<36x256xf32, #tpu.memory_space<vmem>>, vector<4x256xf32>
    tpu.vector_store %arg6[%c4, %c0_7], %10 {strides = array<i32>} : memref<36x256xf32, #tpu.memory_space<vmem>>, vector<4x256xf32>,
    %c15_i32 = arith.constant 15 : i32
    %12 = tpu.dynamic_rotate %1 by %c15_i32 dim 1 : vector<4x256xf32>, i32 -> vector<4x256xf32>
    %c2 = arith.constant 2 : index
    %c0_8 = arith.constant 0 : index
    %13 = vector.load %arg4[%c2, %c0_8] : memref<9x256xf32, #tpu.memory_space<vmem>>, vector<1x256xf32>
    %14 = vector.broadcast %13 : vector<1x256xf32> to vector<4x256xf32>
    %15 = arith.mulf %12, %14 : vector<4x256xf32>
    %c8 = arith.constant 8 : index
    %c0_9 = arith.constant 0 : index
    %16 = vector.load %arg6[%c8, %c0_9] : memref<36x256xf32, #tpu.memory_space<vmem>>, vector<4x256xf32>
    tpu.vector_store %arg6[%c8, %c0_9], %15 {strides = array<i32>} : memref<36x256xf32, #tpu.memory_space<vmem>>, vector<4x256xf32>,
    %c1_i32 = arith.constant 1 : i32
    %17 = tpu.dynamic_rotate %1 by %c1_i32 dim 1 : vector<4x256xf32>, i32 -> vector<4x256xf32>
    %c3 = arith.constant 3 : index
    %c0_10 = arith.constant 0 : index
    %18 = vector.load %arg4[%c3, %c0_10] : memref<9x256xf32, #tpu.memory_space<vmem>>, vector<1x256xf32>
    %19 = vector.broadcast %18 : vector<1x256xf32> to vector<4x256xf32>
    %20 = arith.mulf %17, %19 : vector<4x256xf32>
    %c12 = arith.constant 12 : index
    %c0_11 = arith.constant 0 : index
    %21 = vector.load %arg6[%c12, %c0_11] : memref<36x256xf32, #tpu.memory_space<vmem>>, vector<4x256xf32>
    tpu.vector_store %arg6[%c12, %c0_11], %20 {strides = array<i32>} : memref<36x256xf32, #tpu.memory_space<vmem>>, vector<4x256xf32>,
    %c4_12 = arith.constant 4 : index
    %c0_13 = arith.constant 0 : index
    %22 = vector.load %arg4[%c4_12, %c0_13] : memref<9x256xf32, #tpu.memory_space<vmem>>, vector<1x256xf32>
    %23 = vector.broadcast %22 : vector<1x256xf32> to vector<4x256xf32>
    %24 = arith.mulf %1, %23 : vector<4x256xf32>
    %c16 = arith.constant 16 : index
    %c0_14 = arith.constant 0 : index
    %25 = vector.load %arg6[%c16, %c0_14] : memref<36x256xf32, #tpu.memory_space<vmem>>, vector<4x256xf32>
    tpu.vector_store %arg6[%c16, %c0_14], %24 {strides = array<i32>} : memref<36x256xf32, #tpu.memory_space<vmem>>, vector<4x256xf32>,
    %c255_i32 = arith.constant 255 : i32
    %26 = tpu.dynamic_rotate %1 by %c255_i32 dim 1 : vector<4x256xf32>, i32 -> vector<4x256xf32>
    %c5 = arith.constant 5 : index
    %c0_15 = arith.constant 0 : index
    %27 = vector.load %arg4[%c5, %c0_15] : memref<9x256xf32, #tpu.memory_space<vmem>>, vector<1x256xf32>
    %28 = vector.broadcast %27 : vector<1x256xf32> to vector<4x256xf32>
    %29 = arith.mulf %26, %28 : vector<4x256xf32>
    %c20 = arith.constant 20 : index
    %c0_16 = arith.constant 0 : index
    %30 = vector.load %arg6[%c20, %c0_16] : memref<36x256xf32, #tpu.memory_space<vmem>>, vector<4x256xf32>
    tpu.vector_store %arg6[%c20, %c0_16], %29 {strides = array<i32>} : memref<36x256xf32, #tpu.memory_space<vmem>>, vector<4x256xf32>,
    %c241_i32 = arith.constant 241 : i32
    %31 = tpu.dynamic_rotate %1 by %c241_i32 dim 1 : vector<4x256xf32>, i32 -> vector<4x256xf32>
    %c6 = arith.constant 6 : index
    %c0_17 = arith.constant 0 : index
    %32 = vector.load %arg4[%c6, %c0_17] : memref<9x256xf32, #tpu.memory_space<vmem>>, vector<1x256xf32>
    %33 = vector.broadcast %32 : vector<1x256xf32> to vector<4x256xf32>
    %34 = arith.mulf %31, %33 : vector<4x256xf32>
    %c24 = arith.constant 24 : index
    %c0_18 = arith.constant 0 : index
    %35 = vector.load %arg6[%c24, %c0_18] : memref<36x256xf32, #tpu.memory_space<vmem>>, vector<4x256xf32>
    tpu.vector_store %arg6[%c24, %c0_18], %34 {strides = array<i32>} : memref<36x256xf32, #tpu.memory_space<vmem>>, vector<4x256xf32>,
    %c240_i32 = arith.constant 240 : i32
    %36 = tpu.dynamic_rotate %1 by %c240_i32 dim 1 : vector<4x256xf32>, i32 -> vector<4x256xf32>
    %c7 = arith.constant 7 : index
    %c0_19 = arith.constant 0 : index
    %37 = vector.load %arg4[%c7, %c0_19] : memref<9x256xf32, #tpu.memory_space<vmem>>, vector<1x256xf32>
    %38 = vector.broadcast %37 : vector<1x256xf32> to vector<4x256xf32>
    %39 = arith.mulf %36, %38 : vector<4x256xf32>
    %c28 = arith.constant 28 : index
    %c0_20 = arith.constant 0 : index
    %40 = vector.load %arg6[%c28, %c0_20] : memref<36x256xf32, #tpu.memory_space<vmem>>, vector<4x256xf32>
    tpu.vector_store %arg6[%c28, %c0_20], %39 {strides = array<i32>} : memref<36x256xf32, #tpu.memory_space<vmem>>, vector<4x256xf32>,
    %c239_i32 = arith.constant 239 : i32
    %41 = tpu.dynamic_rotate %1 by %c239_i32 dim 1 : vector<4x256xf32>, i32 -> vector<4x256xf32>
    %c8_21 = arith.constant 8 : index
    %c0_22 = arith.constant 0 : index
    %42 = vector.load %arg4[%c8_21, %c0_22] : memref<9x256xf32, #tpu.memory_space<vmem>>, vector<1x256xf32>
    %43 = vector.broadcast %42 : vector<1x256xf32> to vector<4x256xf32>
    %44 = arith.mulf %41, %43 : vector<4x256xf32>
    %c32 = arith.constant 32 : index
    %c0_23 = arith.constant 0 : index
    %45 = vector.load %arg6[%c32, %c0_23] : memref<36x256xf32, #tpu.memory_space<vmem>>, vector<4x256xf32>
    tpu.vector_store %arg6[%c32, %c0_23], %44 {strides = array<i32>} : memref<36x256xf32, #tpu.memory_space<vmem>>, vector<4x256xf32>,
    %c0_24 = arith.constant 0 : index
    %c0_25 = arith.constant 0 : index
    %46 = vector.load %arg2[%c0_24, %c0_25] : memref<8x36xf32, #tpu.memory_space<vmem>>, vector<8x36xf32>
    %c0_26 = arith.constant 0 : index
    %c0_27 = arith.constant 0 : index
    %47 = vector.load %arg6[%c0_26, %c0_27] : memref<36x256xf32, #tpu.memory_space<vmem>>, vector<36x256xf32>
    %cst = arith.constant dense<0.000000e+00> : vector<8x256xf32>
    %48 = tpu.matmul %46, %47, %cst {dimension_numbers = #tpu.dot_dimension_numbers<[1], [0], [0], [1], [0, 0, 1, 1], [], []>} : vector<8x36xf32>, vector<36x256xf32>, vector<8x256xf32> -> vector<8x256xf32>
    %c0_28 = arith.constant 0 : index
    %c0_29 = arith.constant 0 : index
    %49 = vector.load %arg3[%c0_28, %c0_29] : memref<8x1xf32, #tpu.memory_space<vmem>>, vector<8x1xf32>
    %50 = vector.broadcast %49 : vector<8x1xf32> to vector<8x256xf32>
    %51 = arith.addf %48, %50 : vector<8x256xf32>
    %52 = arith.negf %51 : vector<8x256xf32>
    %53 = math.exp %52 : vector<8x256xf32>
    %cst_30 = arith.constant 1.000000e+00 : f32
    %54 = vector.broadcast %cst_30 : f32 to vector<8x256xf32>
    %55 = arith.addf %54, %53 : vector<8x256xf32>
    %56 = arith.divf %54, %55 : vector<8x256xf32>
    %57 = arith.mulf %51, %56 : vector<8x256xf32>
    %c0_31 = arith.constant 0 : index
    %c0_32 = arith.constant 0 : index
    %c0_33 = arith.constant 0 : index
    %58 = vector.load %arg5[%c0_31, %c0_32, %c0_33] : memref<1x8x256xf32, #tpu.memory_space<vmem>>, vector<1x8x256xf32>
    %59 = vector.shape_cast %58 : vector<1x8x256xf32> to vector<8x256xf32>
    %60 = vector.shape_cast %57 : vector<8x256xf32> to vector<1x8x256xf32>
    tpu.vector_store %arg5[%c0_31, %c0_32, %c0_33], %60 {strides = array<i32>} : memref<1x8x256xf32, #tpu.memory_space<vmem>>, vector<1x8x256xf32>,
    return
  }
  func.func @transform_0(%arg0: i32) -> (i32, i32, i32) {
    %c0_i32 = arith.constant 0 : i32
    %c0_i32_0 = arith.constant 0 : i32
    %c0_i32_1 = arith.constant 0 : i32
    return %arg0, %c0_i32, %c0_i32_0 : i32, i32, i32
  }
  func.func @transform_1(%arg0: i32) -> (i32, i32) {
    %c0_i32 = arith.constant 0 : i32
    %c0_i32_0 = arith.constant 0 : i32
    %c0_i32_1 = arith.constant 0 : i32
    return %c0_i32, %c0_i32_0 : i32, i32
  }
  func.func @transform_2(%arg0: i32) -> (i32, i32) {
    %c0_i32 = arith.constant 0 : i32
    %c0_i32_0 = arith.constant 0 : i32
    %c0_i32_1 = arith.constant 0 : i32
    return %c0_i32, %c0_i32_0 : i32, i32
  }
  func.func @transform_3(%arg0: i32) -> (i32, i32) {
    %c0_i32 = arith.constant 0 : i32
    %c0_i32_0 = arith.constant 0 : i32
    %c0_i32_1 = arith.constant 0 : i32
    return %c0_i32, %c0_i32_0 : i32, i32
  }
  func.func @transform_4(%arg0: i32) -> (i32, i32, i32) {
    %c0_i32 = arith.constant 0 : i32
    %c0_i32_0 = arith.constant 0 : i32
    %c0_i32_1 = arith.constant 0 : i32
    return %arg0, %c0_i32, %c0_i32_0 : i32, i32, i32
  }
}

</mosaic_0001>

<llo_original>
// kernel: tpu_custom_call.1
$region0: #{tpu_custom_call.1}
  #allocation0 [shape = 'u32[]', space=smem, size = 0x4, offset = 0x4, fixed_abs, tag = 'smem constant byte address 0x4 - core index']
  #allocation1 [shape = 'u32[144,128]{1,0:T(1,128)}', space=vmem, size = 0x12000, scoped, tag = 'internal scratch']
  #allocation2 [shape = 'f32[36,256]{1,0:T(8,128)}', space=vmem, size = 0xa000, scoped, tag = 'scratch operand']
  %s0 = inlined_call_operand.hbm [shape: f32[2,4,256], index: 0, kind: input, shape index: {}]
  %s1 = inlined_call_operand.vmem [shape: f32[8,36], index: 1, kind: input, shape index: {}]
  %s2 = inlined_call_operand.vmem [shape: f32[8,1], index: 2, kind: input, shape index: {}]
  %s3 = inlined_call_operand.hbm [shape: f32[9,256], index: 3, kind: input, shape index: {}]
  %s4 = inlined_call_operand.hbm [shape: f32[2,8,256], index: 4, kind: output, shape index: {}]
  %s5 = sld [smem:[#allocation0]]
  $region57: #{tpu_custom_call.1} parent=0
    _
  %s7 = ssub.s32 1, %s5
  %s8 = scalar_select 0, %s7, %s5
  $region1: #{tpu_custom_call.1} parent=0
    #allocation3 [shape = 'u8[8192]{0}', space=vmem, size = 0x2000, scoped, tag = 'input window, operand 0']
    #allocation4 [shape = 's32[2]{0}', space=sflag, size = 0x8, scoped, tag = 'scoped memory for tpu_custom_call.1']
    #allocation5 [shape = 's32[2]{0}', space=sflag, size = 0x8, scoped, tag = 'scoped memory for tpu_custom_call.1']
    #allocation6 [shape = 'u8[16384]{0}', space=vmem, size = 0x4000, scoped, tag = 'input window, operand 3, single buffered']
    #allocation7 [shape = 's32[1]{0}', space=sflag, size = 0x4, scoped, tag = 'scoped memory for tpu_custom_call.1']
    #allocation8 [shape = 'u8[16384]{0}', space=vmem, size = 0x4000, scoped, tag = 'output window, operand 0']
    %9 = vsyncpa [#allocation4], 0
    %s10 = scalar_lea.sflag [#allocation4], 1
    %11 = vsyncpa %s10, 0
    %12 = vsyncpa [#allocation7], 0
    %13 = vsyncpa [#allocation5], 0
    %s14 = scalar_lea.sflag [#allocation5], 1
    %15 = vsyncpa %s14, 0
    loop: start=0, step=1, limit=4
    $region2: #{tpu_custom_call.1} parent=1 // loop_pre_header
      _
    $region3: #{tpu_custom_call.1} parent=1 // loop_header
      %s17 = sphi 0, %s21
      %p18 = scmp.ge.s32.totalorder %s17, 4
      %s27 = sphi 0, %s29
      %s30 = sphi 0, %s27
      %s31 = sphi 0, %s30
      %s47 = sphi 0, %s31
      %s51 = sphi 0, %s51
      %s53 = sphi 0, %s51
      %s54 = sphi 0, %s53
      %s68 = sphi 0, %s54
      %s72 = sphi 0, %s72
      %s74 = sphi 0, %s72
      %s75 = sphi 0, %s74
      %s89 = sphi 0, %s75
      %s93 = sphi 0, %s93
      %s95 = sphi 0, %s93
      %s96 = sphi 0, %s95
      %s110 = sphi 0, %s96
      %s116 = sphi 0, %s118
      %s119 = sphi 0, %s116
      %s120 = sphi 0, %s119
      %s136 = sphi 0, %s120
    $region4: #{tpu_custom_call.1} parent=1 // loop_header_branch
      %20 = sbr.rel (%p18) target = $region8
    $region5: #{tpu_custom_call.1} parent=1 // loop_body
      %s22 = ssub.s32 %s17, 1
      %s23 = ssub.s32 %s17, 2
      %s24 = sadd.s32 %s17, 1
      %s25 = ssub.s32 %s17, %s24
      %p26 = scmp.eq.s32.totalorder %s25, 0
      %s28 = sadd.s32 %s27, 1
      %s29 = scalar_select %p26, %s27, %s28
      %p32 = pneg %p26
      %p33 = scmp.eq.s32.totalorder %s17, 1
      %p34 = por %p32, %p33
      %p35 = scmp.ne.s32.totalorder %s27, %s30
      %p36 = scmp.eq.s32.totalorder %s17, 0
      %p37 = por %p35, %p36
      %p38 = scmp.ne.s32.totalorder %s27, %s30
      %p39 = scmp.eq.s32.totalorder %s22, 1
      %p40 = por %p38, %p39
      %p41 = scmp.ne.s32.totalorder %s30, %s31
      %p42 = scmp.eq.s32.totalorder %s22, 0
      %p43 = por %p41, %p42
      %p44 = scmp.ne.s32.totalorder %s30, %s31
      %p45 = scmp.eq.s32.totalorder %s23, 1
      %p46 = por %p44, %p45
      %p48 = scmp.ne.s32.totalorder %s31, %s47
      %p49 = scmp.eq.s32.totalorder %s23, 0
      %p50 = por %p48, %p49
      %s52 = sadd.s32 %s51, 1
      %p55 = scmp.eq.s32.totalorder %s17, 1
      %p56 = scmp.ne.s32.totalorder %s51, %s53
      %p57 = scmp.eq.s32.totalorder %s17, 0
      %p58 = por %p56, %p57
      %p59 = scmp.ne.s32.totalorder %s51, %s53
      %p60 = scmp.eq.s32.totalorder %s22, 1
      %p61 = por %p59, %p60
      %p62 = scmp.ne.s32.totalorder %s53, %s54
      %p63 = scmp.eq.s32.totalorder %s22, 0
      %p64 = por %p62, %p63
      %p65 = scmp.ne.s32.totalorder %s53, %s54
      %p66 = scmp.eq.s32.totalorder %s23, 1
      %p67 = por %p65, %p66
      %p69 = scmp.ne.s32.totalorder %s54, %s68
      %p70 = scmp.eq.s32.totalorder %s23, 0
      %p71 = por %p69, %p70
      %s73 = sadd.s32 %s72, 1
      %p76 = scmp.eq.s32.totalorder %s17, 1
      %p77 = scmp.ne.s32.totalorder %s72, %s74
      %p78 = scmp.eq.s32.totalorder %s17, 0
      %p79 = por %p77, %p78
      %p80 = scmp.ne.s32.totalorder %s72, %s74
      %p81 = scmp.eq.s32.totalorder %s22, 1
      %p82 = por %p80, %p81
      %p83 = scmp.ne.s32.totalorder %s74, %s75
      %p84 = scmp.eq.s32.totalorder %s22, 0
      %p85 = por %p83, %p84
      %p86 = scmp.ne.s32.totalorder %s74, %s75
      %p87 = scmp.eq.s32.totalorder %s23, 1
      %p88 = por %p86, %p87
      %p90 = scmp.ne.s32.totalorder %s75, %s89
      %p91 = scmp.eq.s32.totalorder %s23, 0
      %p92 = por %p90, %p91
      %s94 = sadd.s32 %s93, 1
      %p97 = scmp.eq.s32.totalorder %s17, 1
      %p98 = scmp.ne.s32.totalorder %s93, %s95
      %p99 = scmp.eq.s32.totalorder %s17, 0
      %p100 = por %p98, %p99
      %p101 = scmp.ne.s32.totalorder %s93, %s95
      %p102 = scmp.eq.s32.totalorder %s22, 1
      %p103 = por %p101, %p102
      %p104 = scmp.ne.s32.totalorder %s95, %s96
      %p105 = scmp.eq.s32.totalorder %s22, 0
      %p106 = por %p104, %p105
      %p107 = scmp.ne.s32.totalorder %s95, %s96
      %p108 = scmp.eq.s32.totalorder %s23, 1
      %p109 = por %p107, %p108
      %p111 = scmp.ne.s32.totalorder %s96, %s110
      %p112 = scmp.eq.s32.totalorder %s23, 0
      %p113 = por %p111, %p112
      %s114 = ssub.s32 %s17, %s24
      %p115 = scmp.eq.s32.totalorder %s114, 0
      %s117 = sadd.s32 %s116, 1
      %s118 = scalar_select %p115, %s116, %s117
      %p121 = pneg %p115
      %p122 = scmp.eq.s32.totalorder %s17, 1
      %p123 = por %p121, %p122
      %p124 = scmp.ne.s32.totalorder %s116, %s119
      %p125 = scmp.eq.s32.totalorder %s17, 0
      %p126 = por %p124, %p125
      %p127 = scmp.ne.s32.totalorder %s116, %s119
      %p128 = scmp.eq.s32.totalorder %s22, 1
      %p129 = por %p127, %p128
      %p130 = scmp.ne.s32.totalorder %s119, %s120
      %p131 = scmp.eq.s32.totalorder %s22, 0
      %p132 = por %p130, %p131
      %p133 = scmp.ne.s32.totalorder %s119, %s120
      %p134 = scmp.eq.s32.totalorder %s23, 1
      %p135 = por %p133, %p134
      %p137 = scmp.ne.s32.totalorder %s120, %s136
      %p138 = scmp.eq.s32.totalorder %s23, 0
      %p139 = por %p137, %p138
      %p140 = scmp.le.s32.totalorder 1, %s17
      %p141 = scmp.lt.s32.totalorder %s17, 3
      %p142 = pnand %p140, %p141
      %p143 = pneg %p142
      // Predicated region
      $region9: #{tpu_custom_call.1} parent=5 // pred_check
        _
      $region10: #{tpu_custom_call.1} parent=5 // pred_check_branch
        %145 = sbr.rel (%p142) target = $region12
      $region11: #{tpu_custom_call.1} parent=5 // pred_region
        %s146 = ssub.s32 %s17, 1
        // Predicated region
        $region13: #{tpu_custom_call.1} parent=11 // pred_check
          %p147 = pneg %p64
        $region14: #{tpu_custom_call.1} parent=11 // pred_check_branch
          %149 = sbr.rel (%p147) target = $region16
        $region15: #{tpu_custom_call.1} parent=11 // pred_region
          _
        $region16: #{tpu_custom_call.1} parent=11 // pred_fallthru
          _
        // Predicated region
        $region17: #{tpu_custom_call.1} parent=11 // pred_check
          %p150 = pneg %p85
        $region18: #{tpu_custom_call.1} parent=11 // pred_check_branch
          %152 = sbr.rel (%p150) target = $region20
        $region19: #{tpu_custom_call.1} parent=11 // pred_region
          _
        $region20: #{tpu_custom_call.1} parent=11 // pred_fallthru
          _
        // Predicated region
        $region21: #{tpu_custom_call.1} parent=11 // pred_check
          %p153 = pneg %p106
        $region22: #{tpu_custom_call.1} parent=11 // pred_check_branch
          %155 = sbr.rel (%p153) target = $region24
        $region23: #{tpu_custom_call.1} parent=11 // pred_region
          %s157 = ssub.s32 512, 512
          %158 = vsyncadd [#allocation7], %s157
          %s159 = sshll.u32 [#allocation6], 4
          %s160 = int_to_ptr.vmem [resolvable:$true] %s159
          %165 = dma.hbm_to_vmem [thread:$0]  %s3, 512, %s160, [#allocation7], 256, 256, 16
        $region24: #{tpu_custom_call.1} parent=11 // pred_fallthru
          _
      $region12: #{tpu_custom_call.1} parent=5 // pred_fallthru
        _
      %p166 = scmp.lt.s32.totalorder %s17, 2
      // Predicated region
      $region25: #{tpu_custom_call.1} parent=5 // pred_check
        %p167 = pneg %p166
      $region26: #{tpu_custom_call.1} parent=5 // pred_check_branch
        %169 = sbr.rel (%p167) target = $region28
      $region27: #{tpu_custom_call.1} parent=5 // pred_region
        // Predicated region
        $region29: #{tpu_custom_call.1} parent=27 // pred_check
          %p170 = pneg %p37
        $region30: #{tpu_custom_call.1} parent=27 // pred_check_branch
          %172 = sbr.rel (%p170) target = $region32
        $region31: #{tpu_custom_call.1} parent=27 // pred_region
          %s173 = sand.u32 %s27, 1
          %s174 = scalar_lea.sflag [#allocation4], %s173
          %s175 = sand.u32 %s27, 1
          %s176 = smul.addr %s175, 8
          %s177 = scalar_lea.vmem [#allocation3], %s176
          %s179 = ssub.s32 128, 128
          %180 = vsyncadd %s174, %s179
          %s181 = smul.addr %s17, 2
          %s182 = smul.addr %s181, 64
          %s183 = scalar_lea.hbm %s0, %s182
          %s185 = sshll.u32 %s177, 4
          %s186 = int_to_ptr.vmem [resolvable:$true] %s185
          %188 = dma.hbm_to_vmem [thread:$0]  %s183, 128, %s186, %s174
        $region32: #{tpu_custom_call.1} parent=27 // pred_fallthru
          _
      $region28: #{tpu_custom_call.1} parent=5 // pred_fallthru
        _
      %p189 = scmp.le.s32.totalorder 1, %s17
      %p190 = scmp.lt.s32.totalorder %s17, 3
      %p191 = pnand %p189, %p190
      %p192 = pneg %p191
      // Predicated region
      $region33: #{tpu_custom_call.1} parent=5 // pred_check
        _
      $region34: #{tpu_custom_call.1} parent=5 // pred_check_branch
        %194 = sbr.rel (%p191) target = $region36
      $region35: #{tpu_custom_call.1} parent=5 // pred_region
        %s195 = ssub.s32 %s17, 1
        %s196 = sand.u32 %s30, 1
        %s197 = scalar_lea.sflag [#allocation4], %s196
        %s198 = sand.u32 %s30, 1
        %s199 = smul.addr %s198, 8
        %s200 = scalar_lea.vmem [#allocation3], %s199
        // Predicated region
        $region37: #{tpu_custom_call.1} parent=35 // pred_check
          %p201 = pneg %p43
        $region38: #{tpu_custom_call.1} parent=35 // pred_check_branch
          %203 = sbr.rel (%p201) target = $region40
        $region39: #{tpu_custom_call.1} parent=35 // pred_region
          %204 = dma.done %s197, 128
        $region40: #{tpu_custom_call.1} parent=35 // pred_fallthru
          _
        // Predicated region
        $region41: #{tpu_custom_call.1} parent=35 // pred_check
          %p205 = pneg %p106
        $region42: #{tpu_custom_call.1} parent=35 // pred_check_branch
          %207 = sbr.rel (%p205) target = $region44
        $region43: #{tpu_custom_call.1} parent=35 // pred_region
          %208 = dma.done [#allocation7], 512
        $region44: #{tpu_custom_call.1} parent=35 // pred_fallthru
          _
        %s209 = sand.u32 %s30, 1
        %s210 = scalar_lea.sflag [#allocation4], %s209
        %s211 = sand.u32 %s30, 1
        %s212 = smul.addr %s211, 8
        %s213 = scalar_lea.vmem [#allocation3], %s212
        %p214 = pneg %p43
        %p215 = pneg %p40
        %p216 = pneg %p64
        %p217 = pneg %p61
        %p218 = pneg %p85
        %p219 = pneg %p82
        %p220 = pneg %p106
        %p221 = pneg %p103
        %p222 = pneg %p132
        %p223 = pneg %p129
        %s224 = sand.u32 %s119, 1
        %s225 = scalar_lea.sflag [#allocation5], %s224
        %s226 = sand.u32 %s119, 1
        %s227 = smul.addr %s226, 16
        %s228 = scalar_lea.vmem [#allocation8], %s227
        %v229 = vld [vmem:[%s200] sm:$0xff]
        %v231 = vcombine.high %v229, %v229
        %233 = vrot.lane.b32.xlu0 %v229, 17
        %v234 = vpop.permute.xlu0 %233
        %235 = vrot.lane.b32.xlu0 %v231, 17
        %v236 = vpop.permute.xlu0 %235
        %v237 = vlaneseq
        %v238 = vand.u32 %v237, 127
        %vm239 = vcmp.lt.s32.totalorder %v238, 17
        %v240 = vsel %vm239, %v234, %v236
        %v241 = vsel %vm239, %v236, %v234
        %v242 = vld [vmem:[#allocation6] ss:$8 sm:$0x3]
        %v244 = vlaneseq
        %v245 = vshrl.u32 %v244, 7
        %v246 = vsub.s32 0, %v245
        %v247 = vrot.slane %v242, %v246
        %v248 = vlaneseq
        %v249 = vshrl.u32 %v248, 7
        %v250 = vsub.s32 1, %v249
        %v251 = vrot.slane %v242, %v250
        %v254 = vmul.f32 %v241, %v247
        %v255 = vmul.f32 %v240, %v251
        %256 = vst [vmem:[#allocation2] sm:$0xf] %v254
        %257 = vst [vmem:[#allocation2 + $0x8] sm:$0xf] %v255
        %258 = vrot.lane.b32.xlu0 %v229, 16
        %v259 = vpop.permute.xlu0 %258
        %260 = vrot.lane.b32.xlu0 %v231, 16
        %v261 = vpop.permute.xlu0 %260
        %vm262 = vcmp.lt.s32.totalorder %v238, 16
        %v263 = vsel %vm262, %v259, %v261
        %v264 = vsel %vm262, %v261, %v259
        %s265 = scalar_lea.vmem [#allocation6], 1
        %v266 = vld [vmem:[%s265] ss:$8 sm:$0x3]
        %v268 = vlaneseq
        %v269 = vshrl.u32 %v268, 7
        %v270 = vsub.s32 0, %v269
        %v271 = vrot.slane %v266, %v270
        %v272 = vlaneseq
        %v273 = vshrl.u32 %v272, 7
        %v274 = vsub.s32 1, %v273
        %v275 = vrot.slane %v266, %v274
        %v278 = vmul.f32 %v264, %v271
        %v279 = vmul.f32 %v263, %v275
        %v282 = vrot.slane %v278, 4
        %v283 = vrot.slane %v279, 4
        %286 = vst [vmem:[#allocation2] sm:$0xf0] %v282
        %287 = vst [vmem:[#allocation2 + $0x8] sm:$0xf0] %v283
        %288 = vrot.lane.b32.xlu0 %v229, 15
        %v289 = vpop.permute.xlu0 %288
        %290 = vrot.lane.b32.xlu0 %v231, 15
        %v291 = vpop.permute.xlu0 %290
        %vm292 = vcmp.lt.s32.totalorder %v238, 15
        %v293 = vsel %vm292, %v289, %v291
        %v294 = vsel %vm292, %v291, %v289
        %s295 = scalar_lea.vmem [#allocation6], 2
        %v296 = vld [vmem:[%s295] ss:$8 sm:$0x3]
        %v298 = vlaneseq
        %v299 = vshrl.u32 %v298, 7
        %v300 = vsub.s32 0, %v299
        %v301 = vrot.slane %v296, %v300
        %v302 = vlaneseq
        %v303 = vshrl.u32 %v302, 7
        %v304 = vsub.s32 1, %v303
        %v305 = vrot.slane %v296, %v304
        %v308 = vmul.f32 %v294, %v301
        %v309 = vmul.f32 %v293, %v305
        %310 = vst [vmem:[#allocation2 + $0x10] sm:$0xf] %v308
        %311 = vst [vmem:[#allocation2 + $0x18] sm:$0xf] %v309
        %312 = vrot.lane.b32.xlu0 %v229, 1
        %v313 = vpop.permute.xlu0 %312
        %314 = vrot.lane.b32.xlu0 %v231, 1
        %v315 = vpop.permute.xlu0 %314
        %vm316 = vcmp.lt.s32.totalorder %v238, 1
        %v317 = vsel %vm316, %v313, %v315
        %v318 = vsel %vm316, %v315, %v313
        %s319 = scalar_lea.vmem [#allocation6], 3
        %v320 = vld [vmem:[%s319] ss:$8 sm:$0x3]
        %v322 = vlaneseq
        %v323 = vshrl.u32 %v322, 7
        %v324 = vsub.s32 0, %v323
        %v325 = vrot.slane %v320, %v324
        %v326 = vlaneseq
        %v327 = vshrl.u32 %v326, 7
        %v328 = vsub.s32 1, %v327
        %v329 = vrot.slane %v320, %v328
        %v332 = vmul.f32 %v318, %v325
        %v333 = vmul.f32 %v317, %v329
        %v336 = vrot.slane %v332, 4
        %v337 = vrot.slane %v333, 4
        %340 = vst [vmem:[#allocation2 + $0x10] sm:$0xf0] %v336
        %341 = vst [vmem:[#allocation2 + $0x18] sm:$0xf0] %v337
        %s342 = scalar_lea.vmem [#allocation6], 4
        %v343 = vld [vmem:[%s342] ss:$8 sm:$0x3]
        %v345 = vlaneseq
        %v346 = vshrl.u32 %v345, 7
        %v347 = vsub.s32 0, %v346
        %v348 = vrot.slane %v343, %v347
        %v349 = vlaneseq
        %v350 = vshrl.u32 %v349, 7
        %v351 = vsub.s32 1, %v350
        %v352 = vrot.slane %v343, %v351
        %v353 = vcombine.low %v348, %v352
        %v355 = vmul.f32 %v229, %v353
        %v357 = vcombine.high %v355, %v355
        %359 = vst [vmem:[#allocation2 + $0x20] sm:$0xf] %v355
        %360 = vst [vmem:[#allocation2 + $0x28] sm:$0xf] %v357
        %361 = vrot.lane.b32.xlu0 %v229, 127
        %v362 = vpop.permute.xlu0 %361
        %363 = vrot.lane.b32.xlu0 %v231, 127
        %v364 = vpop.permute.xlu0 %363
        %vm365 = vcmp.lt.s32.totalorder %v238, 127
        %v366 = vsel %vm365, %v362, %v364
        %v367 = vsel %vm365, %v364, %v362
        %s368 = scalar_lea.vmem [#allocation6], 5
        %v369 = vld [vmem:[%s368] ss:$8 sm:$0x3]
        %v371 = vlaneseq
        %v372 = vshrl.u32 %v371, 7
        %v373 = vsub.s32 0, %v372
        %v374 = vrot.slane %v369, %v373
        %v375 = vlaneseq
        %v376 = vshrl.u32 %v375, 7
        %v377 = vsub.s32 1, %v376
        %v378 = vrot.slane %v369, %v377
        %v381 = vmul.f32 %v366, %v374
        %v382 = vmul.f32 %v367, %v378
        %v385 = vrot.slane %v381, 4
        %v386 = vrot.slane %v382, 4
        %389 = vst [vmem:[#allocation2 + $0x20] sm:$0xf0] %v385
        %390 = vst [vmem:[#allocation2 + $0x28] sm:$0xf0] %v386
        %391 = vrot.lane.b32.xlu0 %v229, 113
        %v392 = vpop.permute.xlu0 %391
        %393 = vrot.lane.b32.xlu0 %v231, 113
        %v394 = vpop.permute.xlu0 %393
        %vm395 = vcmp.lt.s32.totalorder %v238, 113
        %v396 = vsel %vm395, %v392, %v394
        %v397 = vsel %vm395, %v394, %v392
        %s398 = scalar_lea.vmem [#allocation6], 6
        %v399 = vld [vmem:[%s398] ss:$8 sm:$0x3]
        %v401 = vlaneseq
        %v402 = vshrl.u32 %v401, 7
        %v403 = vsub.s32 0, %v402
        %v404 = vrot.slane %v399, %v403
        %v405 = vlaneseq
        %v406 = vshrl.u32 %v405, 7
        %v407 = vsub.s32 1, %v406
        %v408 = vrot.slane %v399, %v407
        %v411 = vmul.f32 %v396, %v404
        %v412 = vmul.f32 %v397, %v408
        %413 = vst [vmem:[#allocation2 + $0x30] sm:$0xf] %v411
        %414 = vst [vmem:[#allocation2 + $0x38] sm:$0xf] %v412
        %415 = vrot.lane.b32.xlu0 %v229, 112
        %v416 = vpop.permute.xlu0 %415
        %417 = vrot.lane.b32.xlu0 %v231, 112
        %v418 = vpop.permute.xlu0 %417
        %vm419 = vcmp.lt.s32.totalorder %v238, 112
        %v420 = vsel %vm419, %v416, %v418
        %v421 = vsel %vm419, %v418, %v416
        %s422 = scalar_lea.vmem [#allocation6], 7
        %v423 = vld [vmem:[%s422] ss:$8 sm:$0x3]
        %v425 = vlaneseq
        %v426 = vshrl.u32 %v425, 7
        %v427 = vsub.s32 0, %v426
        %v428 = vrot.slane %v423, %v427
        %v429 = vlaneseq
        %v430 = vshrl.u32 %v429, 7
        %v431 = vsub.s32 1, %v430
        %v432 = vrot.slane %v423, %v431
        %v435 = vmul.f32 %v420, %v428
        %v436 = vmul.f32 %v421, %v432
        %v439 = vrot.slane %v435, 4
        %v440 = vrot.slane %v436, 4
        %443 = vst [vmem:[#allocation2 + $0x30] sm:$0xf0] %v439
        %444 = vst [vmem:[#allocation2 + $0x38] sm:$0xf0] %v440
        %445 = vrot.lane.b32.xlu0 %v229, 111
        %v446 = vpop.permute.xlu0 %445
        %447 = vrot.lane.b32.xlu0 %v231, 111
        %v448 = vpop.permute.xlu0 %447
        %vm449 = vcmp.lt.s32.totalorder %v238, 111
        %v450 = vsel %vm449, %v446, %v448
        %v451 = vsel %vm449, %v448, %v446
        %s452 = scalar_lea.vmem [#allocation6], 16
        %v453 = vld [vmem:[%s452] ss:$8 sm:$0x3]
        %v455 = vlaneseq
        %v456 = vshrl.u32 %v455, 7
        %v457 = vsub.s32 0, %v456
        %v458 = vrot.slane %v453, %v457
        %v459 = vlaneseq
        %v460 = vshrl.u32 %v459, 7
        %v461 = vsub.s32 1, %v460
        %v462 = vrot.slane %v453, %v461
        %v465 = vmul.f32 %v450, %v458
        %v466 = vmul.f32 %v451, %v462
        %467 = vst [vmem:[#allocation2 + $0x40] sm:$0xf] %v465
        %468 = vst [vmem:[#allocation2 + $0x48] sm:$0xf] %v466
        %v469 = vld [vmem:[%s1] sm:$0xff]
        %v470 = vld [vmem:[#allocation2] sm:$0xff]
        %v471 = vld [vmem:[#allocation2 + $0x8] sm:$0xff]
        %v472 = vld [vmem:[#allocation2 + $0x10] sm:$0xff]
        %v473 = vld [vmem:[#allocation2 + $0x18] sm:$0xff]
        %v474 = vld [vmem:[#allocation2 + $0x20] sm:$0xff]
        %v475 = vld [vmem:[#allocation2 + $0x28] sm:$0xff]
        %v476 = vld [vmem:[#allocation2 + $0x30] sm:$0xff]
        %v477 = vld [vmem:[#allocation2 + $0x38] sm:$0xff]
        %v478 = vld [vmem:[#allocation2 + $0x40] sm:$0xf]
        %v479 = vld [vmem:[#allocation2 + $0x48] sm:$0xf]
        %v480 = vld [vmem:[%s2] sm:$0xff]
        %482 = vset.pattern.permute.xlu0 0
        %483 = vperm.xlu0 %482, %v480
        %v484 = vpop.permute.xlu0 %483
        %vm486 = vcmask 293888
        %v488 = vsel %vm486, %v469, 0
        %vm490 = vcmask 1043456
        %v492 = vsel %vm490, %v478, 0
        %v495 = vsel %vm490, %v479, 0
        %497 = vmatprep.subr.mxu0 0.0
        %498 = vmatpush1.msra.mxu0 0.0
        %499 = vmatprep.subr.mxu0 0.0
        %500 = vmatpush1.msra.mxu0 0.0
        %501 = vmatprep.subr.mxu0 0.0
        %502 = vmatpush1.msra.mxu0 0.0
        %503 = vmatprep.subr.mxu0 0.0
        %504 = vmatpush1.msra.mxu0 0.0
        %505 = vmatprep.subr.mxu0 0.0
        %506 = vmatpush1.msra.mxu0 0.0
        %507 = vmatprep.subr.mxu0 0.0
        %508 = vmatpush1.msra.mxu0 0.0
        %509 = vmatprep.subr.mxu0 0.0
        %510 = vmatpush1.msra.mxu0 0.0
        %511 = vmatprep.subr.mxu0 0.0
        %512 = vmatpush1.msra.mxu0 0.0
        %513 = vmatprep.subr.mxu0 0.0
        %514 = vmatpush1.msra.mxu0 0.0
        %515 = vmatprep.subr.mxu0 0.0
        %516 = vmatpush1.msra.mxu0 0.0
        %517 = vmatprep.subr.mxu0 0.0
        %518 = vmatpush1.msra.mxu0 0.0
        %519 = vmatprep.subr.mxu0 %v495
        %520 = vmatpush1.msra.mxu0 %v492
        %521 = vmatprep.subr.mxu0 %v477
        %522 = vmatpush1.msra.mxu0 %v476
        %523 = vmatprep.subr.mxu0 %v475
        %524 = vmatpush1.msra.mxu0 %v474
        %525 = vmatprep.subr.mxu0 %v473
        %526 = vmatpush1.msra.mxu0 %v472
        %527 = vmatprep.subr.mxu0 %v471
        %528 = vmatpush1.msra.mxu0 %v470
        %529 = vmatprep.subr.mxu0 0.0
        %530 = vmatpush2.msra.mxu0 0.0
        %531 = vmatprep.subr.mxu0 0.0
        %532 = vmatpush2.msra.mxu0 0.0
        %533 = vmatprep.subr.mxu0 0.0
        %534 = vmatpush2.msra.mxu0 0.0
        %535 = vmatprep.subr.mxu0 0.0
        %536 = vmatpush2.msra.mxu0 0.0
        %537 = vmatprep.subr.mxu0 0.0
        %538 = vmatpush2.msra.mxu0 0.0
        %539 = vmatprep.subr.mxu0 0.0
        %540 = vmatpush2.msra.mxu0 0.0
        %541 = vmatprep.subr.mxu0 0.0
        %542 = vmatpush2.msra.mxu0 0.0
        %543 = vmatprep.subr.mxu0 0.0
        %544 = vmatpush2.msra.mxu0 0.0
        %545 = vmatprep.subr.mxu0 0.0
        %546 = vmatpush2.msra.mxu0 0.0
        %547 = vmatprep.subr.mxu0 0.0
        %548 = vmatpush2.msra.mxu0 0.0
        %549 = vmatprep.subr.mxu0 0.0
        %550 = vmatpush2.msra.mxu0 0.0
        %551 = vmatprep.subr.mxu0 0.0
        %552 = vmatpush2.msra.mxu0 0.0
        %553 = vmatprep.subr.mxu0 0.0
        %554 = vmatpush2.msra.mxu0 0.0
        %555 = vmatprep.subr.mxu0 0.0
        %556 = vmatpush2.msra.mxu0 0.0
        %557 = vmatprep.subr.mxu0 0.0
        %558 = vmatpush2.msra.mxu0 0.0
        %559 = vmatprep.subr.mxu0 0.0
        %560 = vmatpush2.msra.mxu0 0.0
        %561 = vmatprep.mubr.f32.mxu0 0.0
        %562 = vmatmul.mubr.f32.gmra.mxu0 %v488
        %v563 = vpop.f32.mrf.mxu0
        %v564 = vadd.f32 %v484, %v563
        %v565 = vpop.f32.mrf.mxu0
        %v566 = vadd.f32 %v484, %v565
        %567 = vdwg.mxu0
        %v568 = vxor.u32 %v564, 2147483648
        %v569 = vxor.u32 %v566, 2147483648
        %v570 = vmul.f32 %v568, 1.442695
        %v571 = vpow.pop %v570
        %v572 = vmul.f32 %v569, 1.442695
        %v573 = vpow.pop %v572
        %v574 = vadd.f32 %v571, 1.0
        %v575 = vadd.f32 %v573, 1.0
        %v576 = vrcp.pop %v574
        %v577 = vmul.f32 1.0, %v576
        %v578 = vrcp.pop %v575
        %v579 = vmul.f32 1.0, %v578
        %v580 = vmul.f32 %v564, %v577
        %v581 = vmul.f32 %v566, %v579
        %582 = vst [vmem:[%s228] sm:$0xff] %v580
        %583 = vst [vmem:[%s228 + $0x8] sm:$0xff] %v581
        %s584 = sand.u32 %s119, 1
        %s585 = scalar_lea.sflag [#allocation5], %s584
        %s586 = sand.u32 %s119, 1
        %s587 = smul.addr %s586, 16
        %s588 = scalar_lea.vmem [#allocation8], %s587
        // Predicated region
        $region45: #{tpu_custom_call.1} parent=35 // pred_check
          %p589 = pneg %p129
        $region46: #{tpu_custom_call.1} parent=35 // pred_check_branch
          %591 = sbr.rel (%p589) target = $region48
        $region47: #{tpu_custom_call.1} parent=35 // pred_region
          %s593 = ssub.s32 256, 256
          %594 = vsyncadd %s585, %s593
          %s595 = smul.addr %s22, 2
          %s596 = smul.addr %s595, 128
          %s597 = scalar_lea.hbm %s4, %s596
          %s599 = sshll.u32 %s588, 4
          %s600 = int_to_ptr.vmem [resolvable:$true] %s599
          %602 = dma.vmem_to_hbm [thread:$0]  %s600, 256, %s597, %s585
        $region48: #{tpu_custom_call.1} parent=35 // pred_fallthru
          _
      $region36: #{tpu_custom_call.1} parent=5 // pred_fallthru
        _
      %p603 = scmp.le.s32.totalorder 2, %s17
      // Predicated region
      $region49: #{tpu_custom_call.1} parent=5 // pred_check
        %p604 = pneg %p603
      $region50: #{tpu_custom_call.1} parent=5 // pred_check_branch
        %606 = sbr.rel (%p604) target = $region52
      $region51: #{tpu_custom_call.1} parent=5 // pred_region
        %s607 = ssub.s32 %s17, 2
        // Predicated region
        $region53: #{tpu_custom_call.1} parent=51 // pred_check
          %p608 = pneg %p135
        $region54: #{tpu_custom_call.1} parent=51 // pred_check_branch
          %610 = sbr.rel (%p608) target = $region56
        $region55: #{tpu_custom_call.1} parent=51 // pred_region
          %s611 = sand.u32 %s120, 1
          %s612 = scalar_lea.sflag [#allocation5], %s611
          %s613 = sand.u32 %s120, 1
          %s614 = smul.addr %s613, 16
          %s615 = scalar_lea.vmem [#allocation8], %s614
          %616 = dma.done %s612, 256
        $region56: #{tpu_custom_call.1} parent=51 // pred_fallthru
          _
      $region52: #{tpu_custom_call.1} parent=5 // pred_fallthru
        _
    $region6: #{tpu_custom_call.1} parent=1 // loop_footer
      %s21 = sadd.s32 1, %s17
    $region7: #{tpu_custom_call.1} parent=1 // loop_footer_branch
      %16 = sbr.rel target = $region3
    $region8: #{tpu_custom_call.1} parent=1 // loop_exit
      _
    %617 = vsyncpa [#allocation4], 1
    %s618 = scalar_lea.sflag [#allocation4], 1
    %619 = vsyncpa %s618, 1
    %620 = vsyncpa [#allocation7], 1
    %621 = vsyncpa [#allocation5], 1
    %s622 = scalar_lea.sflag [#allocation5], 1
    %623 = vsyncpa %s622, 1

</llo_original>
